<compile_context>
chip_gen: v7x
topology: tpu7x:2x2x1
jax: 0.10.0
libtpu: 0.0.40
codegen_flags: <defaults>
</compile_context>

<pallas_src>
import functools

import jax
import jax.numpy as jnp
from jax.experimental import pallas as pl
from jax.experimental.pallas import tpu as pltpu


# ---------------------------------------------------------------------------
# Kernels
# ---------------------------------------------------------------------------
def _bn_stats_kernel(x_ref, piv_ref, sum_ref, sq_ref, sum_acc, sq_acc,
                     *, lane_extent, need_mask):
    """Pass 1: per-row shifted sums  sum(x - p)  and  sum((x - p)^2).

    x_ref:   (Nb, Ct, HWt)  tile of the (N, rows, lanes) input
    piv_ref: (Ct, 1)        per-row pivot (running_mean, repacked)
    sum_ref: (Ct, 1)        f32 output, written at the last (n, t) step
    sq_ref:  (Ct, 1)        f32 output, written at the last (n, t) step
    sum_acc: (Ct, HWt)      f32 VMEM scratch
    sq_acc:  (Ct, HWt)      f32 VMEM scratch
    """
    n = pl.program_id(1)
    t = pl.program_id(2)
    is_first = jnp.logical_and(n == 0, t == 0)
    is_last = jnp.logical_and(n == pl.num_programs(1) - 1,
                              t == pl.num_programs(2) - 1)

    @pl.when(is_first)
    def _():
        sum_acc[...] = jnp.zeros_like(sum_acc)
        sq_acc[...] = jnp.zeros_like(sq_acc)

    # Hot loop: pure VPU elementwise work, no cross-lane reduce here.
    x = x_ref[...].astype(jnp.float32)                 # (Nb, Ct, HWt)
    xc = x - piv_ref[...][None]                        # pivot shift (conditioning)
    if need_mask:
        hwt = x.shape[-1]
        lane = jax.lax.broadcasted_iota(jnp.int32, x.shape, x.ndim - 1)
        xc = jnp.where(t * hwt + lane < lane_extent, xc, 0.0)
    sum_acc[...] += xc.sum(axis=0)
    sq_acc[...] += (xc * xc).sum(axis=0)

    @pl.when(is_last)
    def _():
        # Single XLU reduction per accumulator, once per channel tile.
        sum_ref[...] = jnp.sum(sum_acc[...], axis=-1, keepdims=True)
        sq_ref[...] = jnp.sum(sq_acc[...], axis=-1, keepdims=True)


def _bn_apply_kernel(x_ref, scale_ref, shift_ref, y_ref):
    """Pass 2: y = x * scale + shift  (2 VPU ops / element)."""
    x = x_ref[...].astype(jnp.float32)                 # (Nb, rows, HWt)
    y = x * scale_ref[...][None] + shift_ref[...][None]
    y_ref[...] = y.astype(y_ref.dtype)


# ---------------------------------------------------------------------------
# Tiling helpers
# ---------------------------------------------------------------------------
def _pick_lane_tile(lw, rows, itemsize, target_bytes):
    """Lane tile: multiple of 128 (or the full extent if lw <= 128), sized so a
    (rows, tile) block is around `target_bytes`.  Prefers a tile that divides
    lw exactly (no masked last tile) when one exists within 2x of the target."""
    if lw <= 128:
        return lw
    max_mult = max(min(target_bytes // (rows * itemsize * 128), lw // 128), 1)
    for m in range(max_mult, max(max_mult // 2, 1) - 1, -1):
        if lw % (m * 128) == 0:
            return m * 128
    return max_mult * 128          # cdiv grid + in-kernel / store masking


def _pick_tiles(n, rows, lw, itemsize, target_bytes):
    """Pick (batch block, lane tile).  When one batch slice covers the whole
    lane extent and is still small, batch several slices per block so the DMAs
    stay large and the grid-step count stays low."""
    hwt = _pick_lane_tile(lw, rows, itemsize, target_bytes)
    nb = 1
    if hwt == lw:
        per_slice = max(rows * lw * itemsize, 1)
        cap = max(min(n, target_bytes // per_slice), 1)
        for cand in range(cap, 0, -1):
            if n % cand == 0:
                nb = cand
                break
    return nb, hwt


# ---------------------------------------------------------------------------
# Wrapper
# ---------------------------------------------------------------------------
def batch_norm_train(x_nchw, weight, bias, running_mean, running_var,
                     *, eps=1e-5, momentum=0.1):
    """Forward of `_BatchNorm` in training mode.

    Returns (y_nchw, new_running_mean, new_running_var).
    """
    N, C, H, W = x_nchw.shape
    HW = H * W
    L = N * HW
    dtype = x_nchw.dtype
    itemsize = jnp.dtype(dtype).itemsize

    if weight is None:                       # affine=False
        weight = jnp.ones((C,), jnp.float32)
    if bias is None:
        bias = jnp.zeros((C,), jnp.float32)

    # --- channel repack: fold a factor r of HW into C so rows fill sublanes ---
    pack = max((8 * 4) // itemsize, 8)       # 8 (f32) / 16 (bf16) / 32 (int8)
    r = 1
    if C % pack != 0:
        for cand in range(2, pack + 1):
            if HW % cand == 0 and (C * cand) % pack == 0:
                r = cand
                break
    rows = C * r
    lanes = HW // r
    x3 = x_nchw.reshape(N, rows, lanes)      # free reshape, no HBM transpose

    # --- generation-aware VMEM budget and tile targets ---
    try:
        vmem_cap = int(pltpu.get_tpu_info().vmem_capacity_bytes)
    except Exception:
        vmem_cap = 64 << 20                  # safe fallback (v7x per-TC size)
    vmem_budget = int(vmem_cap * 0.85)
    big_vmem = vmem_cap >= (96 << 20)        # v5e/v6e: 128 MiB, v7x: 64 MiB
    p1_target = (6 << 20) if big_vmem else (3 << 20)
    p2_target = (16 << 20) if big_vmem else (8 << 20)

    # ---- Pass 1: per-row shifted sums -------------------------------------
    # Channel-tile axis ("parallel") lets v7x's two TensorCores split the pass.
    ct = rows // 2 if rows % (2 * pack) == 0 else rows
    num_ct = rows // ct
    nb1, hwt1 = _pick_tiles(N, ct, lanes, itemsize, p1_target)
    num_t1 = pl.cdiv(lanes, hwt1)
    need_mask = (lanes % hwt1) != 0

    pivot_c = running_mean.astype(jnp.float32).reshape(C, 1)
    pivot_r = jnp.repeat(pivot_c, r, axis=0) if r > 1 else pivot_c   # (rows, 1)

    p1_vmem = int(min(vmem_budget,
                      max(2 * nb1 * ct * hwt1 * itemsize          # x double-buffer
                          + 2 * ct * hwt1 * 4                     # f32 scratch
                          + (2 << 20),                            # headroom
                          16 << 20)))

    row_spec = pl.BlockSpec((ct, 1), lambda c, n, t: (c, 0))
    row_sum, row_sq = pl.pallas_call(
        functools.partial(_bn_stats_kernel, lane_extent=lanes, need_mask=need_mask),
        out_shape=(jax.ShapeDtypeStruct((rows, 1), jnp.float32),
                   jax.ShapeDtypeStruct((rows, 1), jnp.float32)),
        grid=(num_ct, N // nb1, num_t1),
        in_specs=[pl.BlockSpec((nb1, ct, hwt1), lambda c, n, t: (n, c, t)),
                  row_spec],
        out_specs=(row_spec, row_spec),
        scratch_shapes=[pltpu.VMEM((ct, hwt1), jnp.float32),
                        pltpu.VMEM((ct, hwt1), jnp.float32)],
        compiler_params=pltpu.CompilerParams(
            dimension_semantics=("parallel", "arbitrary", "arbitrary"),
            vmem_limit_bytes=p1_vmem),
    )(x3, pivot_r)

    # ---- Tiny per-channel math in plain JAX ((C,)-sized, negligible) -------
    s1 = row_sum.reshape(C, r).sum(axis=1)          # sum(x - p)   per channel
    s2 = row_sq.reshape(C, r).sum(axis=1)           # sum((x-p)^2) per channel
    inv_l = 1.0 / float(L)
    pivot = running_mean.astype(jnp.float32)
    d_mean = s1 * inv_l                             # E[x - p]
    mean = pivot + d_mean
    var = jnp.maximum(s2 * inv_l - d_mean * d_mean, 0.0)   # biased variance

    inv_std = jax.lax.rsqrt(var + eps)
    scale_c = weight.astype(jnp.float32) * inv_std
    shift_c = bias.astype(jnp.float32) - mean * scale_c

    # Running-stat update (PyTorch: unbiased variance here, biased above).
    # PyTorch raises when N*H*W == 1 in training; we just guard the division.
    bessel = float(L) / max(float(L) - 1.0, 1.0)
    new_rm = ((1.0 - momentum) * running_mean.astype(jnp.float32)
              + momentum * mean).astype(running_mean.dtype)
    new_rv = ((1.0 - momentum) * running_var.astype(jnp.float32)
              + momentum * var * bessel).astype(running_var.dtype)
    # TODO(synk): num_batches_tracked increment (and momentum=None cumulative
    # averaging) is host-side bookkeeping, not a kernel op.

    # ---- Pass 2: y = x*scale + shift (fully parallel, bigger tiles) --------
    scale_r = (jnp.repeat(scale_c.reshape(C, 1), r, axis=0)
               if r > 1 else scale_c.reshape(C, 1))
    shift_r = (jnp.repeat(shift_c.reshape(C, 1), r, axis=0)
               if r > 1 else shift_c.reshape(C, 1))

    nb2, hwt2 = _pick_tiles(N, rows, lanes, itemsize, p2_target)
    num_t2 = pl.cdiv(lanes, hwt2)
    p2_vmem = int(min(vmem_budget,
                      max(4 * nb2 * rows * hwt2 * itemsize + (2 << 20), 16 << 20)))

    xy_spec = pl.BlockSpec((nb2, rows, hwt2), lambda n, t: (n, 0, t))
    ss_spec = pl.BlockSpec((rows, 1), lambda n, t: (0, 0))
    y3 = pl.pallas_call(
        _bn_apply_kernel,
        out_shape=jax.ShapeDtypeStruct((N, rows, lanes), dtype),
        grid=(N // nb2, num_t2),
        in_specs=[xy_spec, ss_spec, ss_spec],
        out_specs=xy_spec,
        compiler_params=pltpu.CompilerParams(
            dimension_semantics=("parallel", "parallel"),
            vmem_limit_bytes=p2_vmem),
    )(x3, scale_r, shift_r)

    return y3.reshape(N, C, H, W), new_rm, new_rv


# ---------------------------------------------------------------------------
# Self-test
# ---------------------------------------------------------------------------
def _reference(x, w, b, rm, rv, eps, momentum):
    mean = jnp.mean(x, axis=(0, 2, 3))
    var = jnp.var(x, axis=(0, 2, 3))
    y = ((x - mean[None, :, None, None])
         / jnp.sqrt(var[None, :, None, None] + eps)
         * w[None, :, None, None] + b[None, :, None, None])
    n_el = x.shape[0] * x.shape[2] * x.shape[3]
    rm_new = (1 - momentum) * rm + momentum * mean
    rv_new = (1 - momentum) * rv + momentum * var * n_el / (n_el - 1)
    return y, rm_new, rv_new


if __name__ == "__main__":
    key = jax.random.PRNGKey(0)
    eps, momentum = 1e-5, 0.1

    # --- Test 1: module-default init, sublane repack path (C=4, f32) --------
    k1, k2 = jax.random.split(key)
    N, C, H, W = 2, 4, 16, 16
    x = jax.random.normal(k1, (N, C, H, W), dtype=jnp.float32)
    weight = jax.random.uniform(k2, (C,), dtype=jnp.float32)   # reset_parameters
    bias = jnp.zeros((C,), jnp.float32)
    rm = jnp.zeros((C,), jnp.float32)
    rv = jnp.ones((C,), jnp.float32)

    y, nrm, nrv = batch_norm_train(x, weight, bias, rm, rv,
                                   eps=eps, momentum=momentum)
    jax.block_until_ready((y, nrm, nrv))
    y_r, rm_r, rv_r = _reference(x, weight, bias, rm, rv, eps, momentum)
    assert jnp.allclose(y, y_r, atol=1e-4, rtol=1e-4)
    assert jnp.allclose(nrm, rm_r, atol=1e-4, rtol=1e-4)
    assert jnp.allclose(nrv, rv_r, atol=1e-4, rtol=1e-4)

    # --- Test 2: non-multiple-of-128 spatial extent + nonzero running stats -
    k3, k4, k5, k6 = jax.random.split(key, 4)
    N2, C2, H2, W2 = 4, 8, 13, 13
    x2 = jax.random.normal(k3, (N2, C2, H2, W2), dtype=jnp.float32) * 1.5 + 0.3
    w2 = jax.random.uniform(k4, (C2,), dtype=jnp.float32)
    b2 = jax.random.normal(k5, (C2,), dtype=jnp.float32) * 0.1
    rm2 = jax.random.normal(k6, (C2,), dtype=jnp.float32) * 0.5
    rv2 = jnp.ones((C2,), jnp.float32)

    y2, nrm2, nrv2 = batch_norm_train(x2, w2, b2, rm2, rv2,
                                      eps=eps, momentum=momentum)
    jax.block_until_ready((y2, nrm2, nrv2))
    y2_r, rm2_r, rv2_r = _reference(x2, w2, b2, rm2, rv2, eps, momentum)
    assert jnp.allclose(y2, y2_r, atol=1e-4, rtol=1e-4)
    assert jnp.allclose(nrm2, rm2_r, atol=1e-4, rtol=1e-4)
    assert jnp.allclose(nrv2, rv2_r, atol=1e-4, rtol=1e-4)

    print("KERNEL_OK")
</pallas_src>

<mosaic_0001>
module attributes {stable_mosaic.version = 11 : i64} {
  func.func @_bn_stats_kernel(%arg0: i32, %arg1: i32, %arg2: i32, %arg3: memref<2x8x128xf32, #tpu.memory_space<vmem>>, %arg4: memref<8x1xf32, #tpu.memory_space<vmem>>, %arg5: memref<8x1xf32, #tpu.memory_space<vmem>>, %arg6: memref<8x1xf32, #tpu.memory_space<vmem>>, %arg7: memref<8x128xf32, #tpu.memory_space<vmem>>, %arg8: memref<8x128xf32, #tpu.memory_space<vmem>>) attributes {dimension_semantics = [#tpu.dimension_semantics<parallel>, #tpu.dimension_semantics<arbitrary>, #tpu.dimension_semantics<arbitrary>], iteration_bounds = array<i64: 1, 1, 1>, scalar_prefetch = 0 : i64, scratch_operands = 2 : i64, tpu.core_type = #tpu.core_type<tc>, window_params = [{transform_indices = @transform_0, window_bounds = array<i64: 2, 8, 128>}, {transform_indices = @transform_1, window_bounds = array<i64: 8, 1>}, {transform_indices = @transform_2, window_bounds = array<i64: 8, 1>}, {transform_indices = @transform_3, window_bounds = array<i64: 8, 1>}]} {
    %c0_i32 = arith.constant 0 : i32
    %0 = arith.cmpi eq, %arg1, %c0_i32 : i32
    %c0_i32_0 = arith.constant 0 : i32
    %1 = arith.cmpi eq, %arg2, %c0_i32_0 : i32
    %2 = arith.andi %0, %1 : i1
    %c0_i32_1 = arith.constant 0 : i32
    %3 = arith.cmpi eq, %arg1, %c0_i32_1 : i32
    %c0_i32_2 = arith.constant 0 : i32
    %4 = arith.cmpi eq, %arg2, %c0_i32_2 : i32
    %5 = arith.andi %3, %4 : i1
    %6 = arith.extui %2 : i1 to i32
    %c0_i32_3 = arith.constant 0 : i32
    %7 = arith.cmpi ne, %6, %c0_i32_3 : i32
    scf.if %7 {
      %cst_18 = arith.constant 0.000000e+00 : f32
      %24 = vector.broadcast %cst_18 : f32 to vector<8x128xf32>
      %c0_19 = arith.constant 0 : index
      %c0_20 = arith.constant 0 : index
      %25 = vector.load %arg7[%c0_19, %c0_20] : memref<8x128xf32, #tpu.memory_space<vmem>>, vector<8x128xf32>
      tpu.vector_store %arg7[%c0_19, %c0_20], %24 {strides = array<i32>} : memref<8x128xf32, #tpu.memory_space<vmem>>, vector<8x128xf32>,
      %cst_21 = arith.constant 0.000000e+00 : f32
      %26 = vector.broadcast %cst_21 : f32 to vector<8x128xf32>
      %c0_22 = arith.constant 0 : index
      %c0_23 = arith.constant 0 : index
      %27 = vector.load %arg8[%c0_22, %c0_23] : memref<8x128xf32, #tpu.memory_space<vmem>>, vector<8x128xf32>
      tpu.vector_store %arg8[%c0_22, %c0_23], %26 {strides = array<i32>} : memref<8x128xf32, #tpu.memory_space<vmem>>, vector<8x128xf32>,
    } else {
    }
    %c0 = arith.constant 0 : index
    %c0_4 = arith.constant 0 : index
    %c0_5 = arith.constant 0 : index
    %8 = vector.load %arg3[%c0, %c0_4, %c0_5] : memref<2x8x128xf32, #tpu.memory_space<vmem>>, vector<2x8x128xf32>
    %c0_6 = arith.constant 0 : index
    %c0_7 = arith.constant 0 : index
    %9 = vector.load %arg4[%c0_6, %c0_7] : memref<8x1xf32, #tpu.memory_space<vmem>>, vector<8x1xf32>
    %10 = vector.shape_cast %9 : vector<8x1xf32> to vector<1x8x1xf32>
    %11 = vector.broadcast %10 : vector<1x8x1xf32> to vector<2x8x128xf32>
    %12 = arith.subf %8, %11 : vector<2x8x128xf32>
    %c0_8 = arith.constant 0 : index
    %c0_9 = arith.constant 0 : index
    %13 = vector.load %arg7[%c0_8, %c0_9] : memref<8x128xf32, #tpu.memory_space<vmem>>, vector<8x128xf32>
    %cst = arith.constant dense<0.000000e+00> : vector<8x128xf32>
    %14 = vector.multi_reduction <add>, %12, %cst [0] : vector<2x8x128xf32> to vector<8x128xf32>
    %15 = arith.addf %13, %14 : vector<8x128xf32>
    %c0_10 = arith.constant 0 : index
    %c0_11 = arith.constant 0 : index
    %16 = vector.load %arg7[%c0_10, %c0_11] : memref<8x128xf32, #tpu.memory_space<vmem>>, vector<8x128xf32>
    tpu.vector_store %arg7[%c0_10, %c0_11], %15 {strides = array<i32>} : memref<8x128xf32, #tpu.memory_space<vmem>>, vector<8x128xf32>,
    %c0_12 = arith.constant 0 : index
    %c0_13 = arith.constant 0 : index
    %17 = vector.load %arg8[%c0_12, %c0_13] : memref<8x128xf32, #tpu.memory_space<vmem>>, vector<8x128xf32>
    %18 = arith.mulf %12, %12 : vector<2x8x128xf32>
    %cst_14 = arith.constant dense<0.000000e+00> : vector<8x128xf32>
    %19 = vector.multi_reduction <add>, %18, %cst_14 [0] : vector<2x8x128xf32> to vector<8x128xf32>
    %20 = arith.addf %17, %19 : vector<8x128xf32>
    %c0_15 = arith.constant 0 : index
    %c0_16 = arith.constant 0 : index
    %21 = vector.load %arg8[%c0_15, %c0_16] : memref<8x128xf32, #tpu.memory_space<vmem>>, vector<8x128xf32>
    tpu.vector_store %arg8[%c0_15, %c0_16], %20 {strides = array<i32>} : memref<8x128xf32, #tpu.memory_space<vmem>>, vector<8x128xf32>,
    %22 = arith.extui %5 : i1 to i32
    %c0_i32_17 = arith.constant 0 : i32
    %23 = arith.cmpi ne, %22, %c0_i32_17 : i32
    scf.if %23 {
      %c0_18 = arith.constant 0 : index
      %c0_19 = arith.constant 0 : index
      %24 = vector.load %arg7[%c0_18, %c0_19] : memref<8x128xf32, #tpu.memory_space<vmem>>, vector<8x128xf32>
      %cst_20 = arith.constant dense<0.000000e+00> : vector<8xf32>
      %25 = vector.multi_reduction <add>, %24, %cst_20 [1] : vector<8x128xf32> to vector<8xf32>
      %26 = vector.shape_cast %25 : vector<8xf32> to vector<8x1xf32>
      %c0_21 = arith.constant 0 : index
      %c0_22 = arith.constant 0 : index
      %27 = vector.load %arg5[%c0_21, %c0_22] : memref<8x1xf32, #tpu.memory_space<vmem>>, vector<8x1xf32>
      tpu.vector_store %arg5[%c0_21, %c0_22], %26 {strides = array<i32>} : memref<8x1xf32, #tpu.memory_space<vmem>>, vector<8x1xf32>,
      %c0_23 = arith.constant 0 : index
      %c0_24 = arith.constant 0 : index
      %28 = vector.load %arg8[%c0_23, %c0_24] : memref<8x128xf32, #tpu.memory_space<vmem>>, vector<8x128xf32>
      %cst_25 = arith.constant dense<0.000000e+00> : vector<8xf32>
      %29 = vector.multi_reduction <add>, %28, %cst_25 [1] : vector<8x128xf32> to vector<8xf32>
      %30 = vector.shape_cast %29 : vector<8xf32> to vector<8x1xf32>
      %c0_26 = arith.constant 0 : index
      %c0_27 = arith.constant 0 : index
      %31 = vector.load %arg6[%c0_26, %c0_27] : memref<8x1xf32, #tpu.memory_space<vmem>>, vector<8x1xf32>
      tpu.vector_store %arg6[%c0_26, %c0_27], %30 {strides = array<i32>} : memref<8x1xf32, #tpu.memory_space<vmem>>, vector<8x1xf32>,
    } else {
    }
    return
  }
  func.func @transform_0(%arg0: i32, %arg1: i32, %arg2: i32) -> (i32, i32, i32) {
    %c0_i32 = arith.constant 0 : i32
    return %arg1, %arg0, %arg2 : i32, i32, i32
  }
  func.func @transform_1(%arg0: i32, %arg1: i32, %arg2: i32) -> (i32, i32) {
    %c0_i32 = arith.constant 0 : i32
    %c0_i32_0 = arith.constant 0 : i32
    return %arg0, %c0_i32 : i32, i32
  }
  func.func @transform_2(%arg0: i32, %arg1: i32, %arg2: i32) -> (i32, i32) {
    %c0_i32 = arith.constant 0 : i32
    %c0_i32_0 = arith.constant 0 : i32
    return %arg0, %c0_i32 : i32, i32
  }
  func.func @transform_3(%arg0: i32, %arg1: i32, %arg2: i32) -> (i32, i32) {
    %c0_i32 = arith.constant 0 : i32
    %c0_i32_0 = arith.constant 0 : i32
    return %arg0, %c0_i32 : i32, i32
  }
}

</mosaic_0001>

<llo_original>
// kernel: tpu_custom_call.1
$region0: #{tpu_custom_call.1}
  #allocation0 [shape = 'u32[]', space=smem, size = 0x4, offset = 0x4, fixed_abs, tag = 'smem constant byte address 0x4 - core index']
  #allocation1 [shape = 'u32[144,128]{1,0:T(1,128)}', space=vmem, size = 0x12000, scoped, tag = 'internal scratch']
  #allocation2 [shape = 'f32[8,128]{1,0:T(8,128)}', space=vmem, size = 0x1000, scoped, tag = 'scratch operand']
  #allocation3 [shape = 'f32[8,128]{1,0:T(8,128)}', space=vmem, size = 0x1000, scoped, tag = 'scratch operand']
  %s0 = inlined_call_operand.hbm [shape: f32[2,8,128], index: 0, kind: input, shape index: {}]
  %s1 = inlined_call_operand.vmem [shape: f32[8,1], index: 1, kind: input, shape index: {}]
  %s2 = inlined_call_operand.vmem [shape: f32[8,1], index: 2, kind: output, shape index: {0}]
  %s3 = inlined_call_operand.vmem [shape: f32[8,1], index: 3, kind: output, shape index: {1}]
  %4 = xla_tuple %s2, %s3
  %s5 = sld [smem:[#allocation0]]
  $region38: #{tpu_custom_call.1} parent=0
    _
  %s7 = ssub.s32 1, %s5
  %s8 = scalar_select 0, %s7, %s5
  $region1: #{tpu_custom_call.1} parent=0
    #allocation4 [shape = 'u8[8192]{0}', space=vmem, size = 0x2000, scoped, tag = 'input window, operand 0, single buffered']
    #allocation5 [shape = 's32[1]{0}', space=sflag, size = 0x4, scoped, tag = 'scoped memory for tpu_custom_call.1']
    %9 = vsyncpa [#allocation5], 0
    // Predicated region
    $region2: #{tpu_custom_call.1} parent=1 // pred_check
      _
    $region3: #{tpu_custom_call.1} parent=1 // pred_check_branch
      %11 = sbr.rel (0) target = $region5
    $region4: #{tpu_custom_call.1} parent=1 // pred_region
      %s13 = ssub.s32 256, 256
      %14 = vsyncadd [#allocation5], %s13
      %s15 = sshll.u32 [#allocation4], 4
      %s16 = int_to_ptr.vmem [resolvable:$true] %s15
      %21 = dma.hbm_to_vmem [thread:$0]  %s0, 256, %s16, [#allocation5], 128, 128, 8
    $region5: #{tpu_custom_call.1} parent=1 // pred_fallthru
      _
    // Predicated region
    $region6: #{tpu_custom_call.1} parent=1 // pred_check
      _
    $region7: #{tpu_custom_call.1} parent=1 // pred_check_branch
      %23 = sbr.rel (0) target = $region9
    $region8: #{tpu_custom_call.1} parent=1 // pred_region
      _
    $region9: #{tpu_custom_call.1} parent=1 // pred_fallthru
      _
    // Predicated region
    $region10: #{tpu_custom_call.1} parent=1 // pred_check
      _
    $region11: #{tpu_custom_call.1} parent=1 // pred_check_branch
      %25 = sbr.rel (0) target = $region13
    $region12: #{tpu_custom_call.1} parent=1 // pred_region
      %26 = dma.done [#allocation5], 256
    $region13: #{tpu_custom_call.1} parent=1 // pred_fallthru
      _
    %p27 = scmp.eq.s32.totalorder 0, 0
    %p28 = scmp.eq.s32.totalorder 0, 0
    %p29 = pnand %p27, %p28
    %p30 = pneg %p29
    // Predicated region
    $region14: #{tpu_custom_call.1} parent=1 // pred_check
      _
    $region15: #{tpu_custom_call.1} parent=1 // pred_check_branch
      %32 = sbr.rel (%p29) target = $region17
    $region16: #{tpu_custom_call.1} parent=1 // pred_region
      %33 = vst [vmem:[#allocation2] sm:$0xff] 0.0
      %34 = vst [vmem:[#allocation3] sm:$0xff] 0.0
    $region17: #{tpu_custom_call.1} parent=1 // pred_fallthru
      _
    %v35 = vld [vmem:[#allocation4] sm:$0xff]
    %v36 = vld [vmem:[#allocation4 + $0x8] sm:$0xff]
    %v37 = vld [vmem:[%s1] sm:$0xff]
    %39 = vset.pattern.permute.xlu0 0
    %40 = vperm.xlu0 %39, %v37
    %v41 = vpop.permute.xlu0 %40
    %v43 = vsub.f32 %v35, %v41
    %v44 = vsub.f32 %v36, %v41
    %v45 = vld [vmem:[#allocation2] sm:$0xff]
    %v46 = vadd.f32 %v43, %v44
    %v47 = vadd.f32 %v45, %v46
    %48 = vst [vmem:[#allocation2] sm:$0xff] %v47
    %v49 = vld [vmem:[#allocation3] sm:$0xff]
    %v50 = vmul.f32 %v43, %v43
    %v51 = vmul.f32 %v44, %v44
    %v52 = vadd.f32 %v50, %v51
    %v53 = vadd.f32 %v49, %v52
    %54 = vst [vmem:[#allocation3] sm:$0xff] %v53
    // Predicated region
    $region18: #{tpu_custom_call.1} parent=1 // pred_check
      _
    $region19: #{tpu_custom_call.1} parent=1 // pred_check_branch
      %56 = sbr.rel (%p29) target = $region21
    $region20: #{tpu_custom_call.1} parent=1 // pred_region
      %v57 = vld [vmem:[#allocation2] sm:$0xff]
      %58 = vadd.xlane.f32.xlu0 %v57
      %v59 = vpop.xlane.xlu0 %58
      %vm60 = vcmask 7168
      %61 = vst.msk [vmem:[%s2] sm:$0xff] %vm60, %v59
      %v62 = vld [vmem:[#allocation3] sm:$0xff]
      %63 = vadd.xlane.f32.xlu0 %v62
      %v64 = vpop.xlane.xlu0 %63
      %65 = vst.msk [vmem:[%s3] sm:$0xff] %vm60, %v64
    $region21: #{tpu_custom_call.1} parent=1 // pred_fallthru
      _
    // Predicated region
    $region22: #{tpu_custom_call.1} parent=1 // pred_check
      _
    $region23: #{tpu_custom_call.1} parent=1 // pred_check_branch
      %67 = sbr.rel (0) target = $region25
    $region24: #{tpu_custom_call.1} parent=1 // pred_region
      _
    $region25: #{tpu_custom_call.1} parent=1 // pred_fallthru
      _
    // Predicated region
    $region26: #{tpu_custom_call.1} parent=1 // pred_check
      _
    $region27: #{tpu_custom_call.1} parent=1 // pred_check_branch
      %69 = sbr.rel (0) target = $region29
    $region28: #{tpu_custom_call.1} parent=1 // pred_region
      _
    $region29: #{tpu_custom_call.1} parent=1 // pred_fallthru
      _
    // Predicated region
    $region30: #{tpu_custom_call.1} parent=1 // pred_check
      _
    $region31: #{tpu_custom_call.1} parent=1 // pred_check_branch
      %71 = sbr.rel (0) target = $region33
    $region32: #{tpu_custom_call.1} parent=1 // pred_region
      _
    $region33: #{tpu_custom_call.1} parent=1 // pred_fallthru
      _
    // Predicated region
    $region34: #{tpu_custom_call.1} parent=1 // pred_check
      _
    $region35: #{tpu_custom_call.1} parent=1 // pred_check_branch
      %73 = sbr.rel (0) target = $region37
    $region36: #{tpu_custom_call.1} parent=1 // pred_region
      _
    $region37: #{tpu_custom_call.1} parent=1 // pred_fallthru
      _
    %74 = vsyncpa [#allocation5], 1

</llo_original>
